<compile_context>
chip_gen: v5e
topology: v5e:2x2
jax: 0.10.0
libtpu: 0.0.40
codegen_flags: <defaults>
</compile_context>

<pallas_src>
import functools

import jax
import jax.numpy as jnp
from jax.experimental import pallas as pl
from jax.experimental.pallas import tpu as pltpu


_VMEM_LIMIT = 32 * 1024 * 1024  # explicit scoped-VMEM budget (safe on v5e/v6e/v7x)


def _round_up(x, m):
    return (x + m - 1) // m * m


# ----------------------------- Pallas kernels ------------------------------ #
def _fused_encoder_kernel(a_ref, x_ref, w1_ref, b1_ref, w23_ref, b23_ref, o_ref):
    """Whole encoder at a single grid point: everything resident in VMEM."""
    cdt = a_ref.dtype
    a = a_ref[...]
    # conv1: A_hat @ (X @ W1) + b1, ReLU.  X@W1 is computed exactly once.
    xw1 = jnp.dot(x_ref[...], w1_ref[...], preferred_element_type=jnp.float32)
    h = jnp.dot(a, xw1.astype(cdt), preferred_element_type=jnp.float32) + b1_ref[...]
    h = jnp.maximum(h, 0.0)
    # conv_mu | conv_logstd fused: A_hat @ (h @ [W_mu|W_logstd]) + [b_mu|b_logstd]
    hw = jnp.dot(h.astype(cdt), w23_ref[...], preferred_element_type=jnp.float32)
    out = jnp.dot(a, hw.astype(cdt), preferred_element_type=jnp.float32) + b23_ref[...]
    o_ref[...] = out.astype(o_ref.dtype)


def _rowwise_matmul_kernel(x_ref, w_ref, o_ref):
    """o = x_tile @ W  (W small, resident; tiled over rows of X)."""
    o_ref[...] = jnp.dot(x_ref[...], w_ref[...],
                         preferred_element_type=jnp.float32).astype(o_ref.dtype)


def _propagate_project_kernel(a_ref, xw_ref, b_ref, w2_ref, o_ref, acc_ref):
    """o[i] = ReLU(sum_k A[i,k] @ XW[k] + b) @ W2  (fused GCN layer-1 + projection)."""
    @pl.when(pl.program_id(1) == 0)
    def _init():
        acc_ref[...] = jnp.zeros_like(acc_ref)

    acc_ref[...] += jnp.dot(a_ref[...], xw_ref[...],
                            preferred_element_type=jnp.float32)

    @pl.when(pl.program_id(1) == pl.num_programs(1) - 1)
    def _finalize():
        h = jnp.maximum(acc_ref[...] + b_ref[...], 0.0)
        o_ref[...] = jnp.dot(h.astype(w2_ref.dtype), w2_ref[...],
                             preferred_element_type=jnp.float32).astype(o_ref.dtype)


def _propagate_kernel(a_ref, xw_ref, b_ref, o_ref, acc_ref, *, apply_relu):
    """out[i] = sum_k A[i,k] @ XW[k] + b (reduction over k), optional ReLU."""
    @pl.when(pl.program_id(1) == 0)
    def _init():
        acc_ref[...] = jnp.zeros_like(acc_ref)

    acc_ref[...] += jnp.dot(a_ref[...], xw_ref[...],
                            preferred_element_type=jnp.float32)

    @pl.when(pl.program_id(1) == pl.num_programs(1) - 1)
    def _finalize():
        out = acc_ref[...] + b_ref[...]
        if apply_relu:
            out = jnp.maximum(out, 0.0)
        o_ref[...] = out.astype(o_ref.dtype)


# ------------------------------ Kernel wrappers ----------------------------- #
def fused_encoder_call(a_hat, x, w1, b1, w23, b23):
    """Single pallas_call running the whole encoder (small graphs)."""
    n, f_in = x.shape
    hid = w1.shape[1]
    f2 = w23.shape[1]
    return pl.pallas_call(
        _fused_encoder_kernel,
        out_shape=jax.ShapeDtypeStruct((n, f2), jnp.float32),
        grid_spec=pltpu.PrefetchScalarGridSpec(
            num_scalar_prefetch=0,
            grid=(1,),
            in_specs=[
                pl.BlockSpec((n, n), lambda i: (0, 0)),       # A_hat
                pl.BlockSpec((n, f_in), lambda i: (0, 0)),    # X
                pl.BlockSpec((f_in, hid), lambda i: (0, 0)),  # W1
                pl.BlockSpec((1, hid), lambda i: (0, 0)),     # b1
                pl.BlockSpec((hid, f2), lambda i: (0, 0)),    # [W_mu|W_logstd] (lane-padded)
                pl.BlockSpec((1, f2), lambda i: (0, 0)),      # [b_mu|b_logstd] (lane-padded)
            ],
            out_specs=pl.BlockSpec((n, f2), lambda i: (0, 0)),
        ),
        compiler_params=pltpu.CompilerParams(
            dimension_semantics=("arbitrary",),
            vmem_limit_bytes=_VMEM_LIMIT),
    )(a_hat, x, w1, b1.reshape(1, hid), w23, b23.reshape(1, f2))


def rowwise_matmul(x, w, *, tile, out_dtype):
    """XW = X @ W, tiled over node rows (W kept resident)."""
    m, k = x.shape
    f = w.shape[1]
    assert m % tile == 0
    return pl.pallas_call(
        _rowwise_matmul_kernel,
        out_shape=jax.ShapeDtypeStruct((m, f), out_dtype),
        grid_spec=pltpu.PrefetchScalarGridSpec(
            num_scalar_prefetch=0,
            grid=(m // tile,),
            in_specs=[
                pl.BlockSpec((tile, k), lambda i: (i, 0)),
                pl.BlockSpec((k, f), lambda i: (0, 0)),
            ],
            out_specs=pl.BlockSpec((tile, f), lambda i: (i, 0)),
        ),
        compiler_params=pltpu.CompilerParams(
            dimension_semantics=("parallel",),
            vmem_limit_bytes=_VMEM_LIMIT),
    )(x, w)


def gcn_layer1_project(a_hat, xw, b1, w2, *, tile, out_dtype):
    """ReLU(A_hat @ XW + b1) @ W2, blocked (tile x tile), f32 accumulator.

    Fuses GCN layer-1 (propagation + bias + ReLU) with the projection by the
    concatenated [W_mu|W_logstd] weights, so the (N, 256) hidden matrix never
    touches HBM.
    """
    n = a_hat.shape[0]
    hid = xw.shape[1]
    f2 = w2.shape[1]
    assert n % tile == 0
    return pl.pallas_call(
        _propagate_project_kernel,
        out_shape=jax.ShapeDtypeStruct((n, f2), out_dtype),
        grid_spec=pltpu.PrefetchScalarGridSpec(
            num_scalar_prefetch=0,
            grid=(n // tile, n // tile),
            in_specs=[
                pl.BlockSpec((tile, tile), lambda i, k: (i, k)),  # A_hat block
                pl.BlockSpec((tile, hid), lambda i, k: (k, 0)),   # XW row slab
                pl.BlockSpec((1, hid), lambda i, k: (0, 0)),      # b1
                pl.BlockSpec((hid, f2), lambda i, k: (0, 0)),     # [W_mu|W_logstd]
            ],
            out_specs=pl.BlockSpec((tile, f2), lambda i, k: (i, 0)),
            scratch_shapes=[pltpu.VMEM((tile, hid), jnp.float32)],
        ),
        compiler_params=pltpu.CompilerParams(
            dimension_semantics=("parallel", "arbitrary"),
            vmem_limit_bytes=_VMEM_LIMIT),
    )(a_hat, xw, b1.reshape(1, hid), w2)


def gcn_propagate(a_hat, xw, b, *, apply_relu, tile, out_dtype):
    """A_hat @ XW + b (optional ReLU), blocked (tile x tile) with f32 accumulator."""
    n = a_hat.shape[0]
    f = xw.shape[1]
    assert n % tile == 0
    kernel = functools.partial(_propagate_kernel, apply_relu=apply_relu)
    return pl.pallas_call(
        kernel,
        out_shape=jax.ShapeDtypeStruct((n, f), out_dtype),
        grid_spec=pltpu.PrefetchScalarGridSpec(
            num_scalar_prefetch=0,
            grid=(n // tile, n // tile),
            in_specs=[
                pl.BlockSpec((tile, tile), lambda i, k: (i, k)),  # A_hat block
                pl.BlockSpec((tile, f), lambda i, k: (k, 0)),     # XW row slab
                pl.BlockSpec((1, f), lambda i, k: (0, 0)),        # bias
            ],
            out_specs=pl.BlockSpec((tile, f), lambda i, k: (i, 0)),
            scratch_shapes=[pltpu.VMEM((tile, f), jnp.float32)],
        ),
        compiler_params=pltpu.CompilerParams(
            dimension_semantics=("parallel", "arbitrary"),
            vmem_limit_bytes=_VMEM_LIMIT),
    )(a_hat, xw, b.reshape(1, f))


# ------------------------------ JAX glue ------------------------------------ #
def normalized_adjacency(edge_index, num_nodes, *, padded_nodes=None):
    """Dense symmetric GCN normalization: D^{-1/2} (A + I) D^{-1/2}.

    If `padded_nodes` is given, the matrix is built directly at the padded size
    (padding rows/cols are all-zero), avoiding a second (N, N) HBM copy.
    """
    n_tot = num_nodes if padded_nodes is None else padded_nodes
    src, dst = edge_index[0], edge_index[1]
    adj = jnp.zeros((n_tot, n_tot), jnp.float32)
    adj = adj.at[src, dst].set(1.0)
    # Self loops only on real nodes.
    diag = (jnp.arange(n_tot) < num_nodes).astype(jnp.float32)
    adj = adj + jnp.diag(diag)
    deg = adj.sum(axis=1)
    d_inv_sqrt = jnp.where(deg > 0, 1.0 / jnp.sqrt(deg), 0.0)
    return adj * d_inv_sqrt[:, None] * d_inv_sqrt[None, :]


def glorot(key, fan_in, fan_out):
    limit = jnp.sqrt(6.0 / (fan_in + fan_out))
    return jax.random.uniform(key, (fan_in, fan_out), jnp.float32, -limit, limit)


def init_params(key, in_channels, hid_dim, out_channels):
    k1, k2, k3 = jax.random.split(key, 3)
    return {
        "conv1_w": glorot(k1, in_channels, hid_dim),
        "conv1_b": jnp.zeros((hid_dim,), jnp.float32),
        "conv_mu_w": glorot(k2, hid_dim, out_channels),
        "conv_mu_b": jnp.zeros((out_channels,), jnp.float32),
        "conv_logstd_w": glorot(k3, hid_dim, out_channels),
        "conv_logstd_b": jnp.zeros((out_channels,), jnp.float32),
    }


def variational_gcn_encoder(params, x, edge_index, *, compute_dtype=jnp.float32,
                            force_tiled=False, tile=256):
    n, f_in = x.shape
    hid = params["conv1_w"].shape[1]
    out_dim = params["conv_mu_w"].shape[1]

    # Fuse conv_mu / conv_logstd: one (hid, 2*out) layer, lane-padded to 128.
    w23 = jnp.concatenate([params["conv_mu_w"], params["conv_logstd_w"]], axis=1)
    b23 = jnp.concatenate([params["conv_mu_b"], params["conv_logstd_b"]], axis=0)
    f2 = _round_up(2 * out_dim, 128)
    w23 = jnp.pad(w23, ((0, 0), (0, f2 - 2 * out_dim))).astype(compute_dtype)
    b23 = jnp.pad(b23, (0, f2 - 2 * out_dim)).astype(jnp.float32)

    w1 = params["conv1_w"].astype(compute_dtype)
    b1 = params["conv1_b"].astype(jnp.float32)
    xc = x.astype(compute_dtype)

    # Rough VMEM footprint of the fully-fused single-call path.
    itemsize = jnp.dtype(compute_dtype).itemsize
    vmem_est = (n * n + n * (f_in + hid + f2)) * itemsize + n * f2 * 4
    use_fused = ((not force_tiled) and vmem_est < 16 * 1024 * 1024 and n % 8 == 0)

    if use_fused:
        a_hat = normalized_adjacency(edge_index, n).astype(compute_dtype)
        out = fused_encoder_call(a_hat, xc, w1, b1, w23, b23)
    else:
        tile_eff = min(tile, _round_up(n, 128))
        n_pad = _round_up(n, tile_eff)
        # Build A_hat directly at padded size (padding rows/cols are zero).
        a_p = normalized_adjacency(edge_index, n,
                                   padded_nodes=n_pad).astype(compute_dtype)
        x_p = jnp.pad(xc, ((0, n_pad - n), (0, 0)))

        # 1) X @ W1, computed once.
        xw1 = rowwise_matmul(x_p, w1, tile=tile_eff, out_dtype=compute_dtype)
        # 2) Fused: ReLU(A_hat @ XW1 + b1) @ [W_mu|W_logstd]  (hidden never hits HBM).
        hw = gcn_layer1_project(a_p, xw1, b1, w23, tile=tile_eff,
                                out_dtype=compute_dtype)
        # 3) Final propagation: A_hat @ hw + [b_mu|b_logstd].
        out = gcn_propagate(a_p, hw, b23, apply_relu=False, tile=tile_eff,
                            out_dtype=jnp.float32)
        out = out[:n]

    return out[:, :out_dim], out[:, out_dim:2 * out_dim]


def _reference(params, x, edge_index):
    a_hat = normalized_adjacency(edge_index, x.shape[0])
    h = jnp.maximum(a_hat @ (x @ params["conv1_w"]) + params["conv1_b"], 0.0)
    mu = a_hat @ (h @ params["conv_mu_w"]) + params["conv_mu_b"]
    ls = a_hat @ (h @ params["conv_logstd_w"]) + params["conv_logstd_b"]
    return mu, ls


if __name__ == "__main__":
    N = 64            # number of nodes
    IN_CHANNELS = 16
    HID_DIM = 256     # fixed by the module
    OUT_CHANNELS = 32

    key = jax.random.PRNGKey(0)
    k_x, k_e, k_p = jax.random.split(key, 3)

    # Node features.
    x = jax.random.normal(k_x, (N, IN_CHANNELS), jnp.float32)

    # Deterministic undirected graph: ring + some random edges (both directions).
    ring_src = jnp.arange(N, dtype=jnp.int32)
    ring_dst = (ring_src + 1) % N
    rnd_src = jax.random.randint(k_e, (2 * N,), 0, N, dtype=jnp.int32)
    rnd_dst = jnp.roll(rnd_src, 7)
    src = jnp.concatenate([ring_src, ring_dst, rnd_src, rnd_dst])
    dst = jnp.concatenate([ring_dst, ring_src, rnd_dst, rnd_src])
    edge_index = jnp.stack([src, dst], axis=0)  # (2, E)

    params = init_params(k_p, IN_CHANNELS, HID_DIM, OUT_CHANNELS)

    mu_ref, logstd_ref = _reference(params, x, edge_index)

    # 1) Small-graph path: single fused pallas_call (f32).
    mu, logstd = variational_gcn_encoder(params, x, edge_index)
    jax.block_until_ready((mu, logstd))
    assert mu.shape == (N, OUT_CHANNELS) and logstd.shape == (N, OUT_CHANNELS)
    assert jnp.allclose(mu, mu_ref, atol=2e-4, rtol=2e-4)
    assert jnp.allclose(logstd, logstd_ref, atol=2e-4, rtol=2e-4)

    # 2) Tiled large-graph path (exercised here on the small graph, padded to 128).
    mu_t, logstd_t = variational_gcn_encoder(params, x, edge_index,
                                             force_tiled=True)
    jax.block_until_ready((mu_t, logstd_t))
    assert mu_t.shape == (N, OUT_CHANNELS) and logstd_t.shape == (N, OUT_CHANNELS)
    assert jnp.allclose(mu_t, mu_ref, atol=2e-4, rtol=2e-4)
    assert jnp.allclose(logstd_t, logstd_ref, atol=2e-4, rtol=2e-4)

    # 3) bf16 inputs (f32 accumulation) for v6e/v7x MXU throughput / half A_hat bytes.
    mu_b, logstd_b = variational_gcn_encoder(params, x, edge_index,
                                             compute_dtype=jnp.bfloat16)
    jax.block_until_ready((mu_b, logstd_b))

    def _rel_err(a, b):
        return float(jnp.max(jnp.abs(a - b)) / (jnp.max(jnp.abs(b)) + 1e-8))

    assert _rel_err(mu_b, mu_ref) < 1e-1
    assert _rel_err(logstd_b, logstd_ref) < 1e-1

    print("KERNEL_OK")
</pallas_src>

<mosaic_0001>
module attributes {stable_mosaic.version = 11 : i64} {
  func.func @_fused_encoder_kernel(%arg0: i32, %arg1: memref<64x64xf32, #tpu.memory_space<vmem>>, %arg2: memref<64x16xf32, #tpu.memory_space<vmem>>, %arg3: memref<16x256xf32, #tpu.memory_space<vmem>>, %arg4: memref<1x256xf32, #tpu.memory_space<vmem>>, %arg5: memref<256x128xf32, #tpu.memory_space<vmem>>, %arg6: memref<1x128xf32, #tpu.memory_space<vmem>>, %arg7: memref<64x128xf32, #tpu.memory_space<vmem>>) attributes {dimension_semantics = [#tpu.dimension_semantics<arbitrary>], iteration_bounds = array<i64: 1>, scalar_prefetch = 0 : i64, scratch_operands = 0 : i64, tpu.core_type = #tpu.core_type<tc>, window_params = [{pipeline_mode = #tpu.pipeline_mode<synchronous>, transform_indices = @transform_0, window_bounds = array<i64: 64, 64>}, {pipeline_mode = #tpu.pipeline_mode<synchronous>, transform_indices = @transform_1, window_bounds = array<i64: 64, 16>}, {pipeline_mode = #tpu.pipeline_mode<synchronous>, transform_indices = @transform_2, window_bounds = array<i64: 16, 256>}, {pipeline_mode = #tpu.pipeline_mode<synchronous>, transform_indices = @transform_3, window_bounds = array<i64: 1, 256>}, {pipeline_mode = #tpu.pipeline_mode<synchronous>, transform_indices = @transform_4, window_bounds = array<i64: 256, 128>}, {pipeline_mode = #tpu.pipeline_mode<synchronous>, transform_indices = @transform_5, window_bounds = array<i64: 1, 128>}, {pipeline_mode = #tpu.pipeline_mode<synchronous>, transform_indices = @transform_6, window_bounds = array<i64: 64, 128>}]} {
    %c0 = arith.constant 0 : index
    %c0_0 = arith.constant 0 : index
    %0 = vector.load %arg1[%c0, %c0_0] : memref<64x64xf32, #tpu.memory_space<vmem>>, vector<64x64xf32>
    %c0_1 = arith.constant 0 : index
    %c0_2 = arith.constant 0 : index
    %1 = vector.load %arg2[%c0_1, %c0_2] : memref<64x16xf32, #tpu.memory_space<vmem>>, vector<64x16xf32>
    %c0_3 = arith.constant 0 : index
    %c0_4 = arith.constant 0 : index
    %2 = vector.load %arg3[%c0_3, %c0_4] : memref<16x256xf32, #tpu.memory_space<vmem>>, vector<16x256xf32>
    %cst = arith.constant dense<0.000000e+00> : vector<64x256xf32>
    %3 = tpu.matmul %1, %2, %cst {dimension_numbers = #tpu.dot_dimension_numbers<[1], [0], [0], [1], [0, 0, 1, 1], [], []>} : vector<64x16xf32>, vector<16x256xf32>, vector<64x256xf32> -> vector<64x256xf32>
    %cst_5 = arith.constant dense<0.000000e+00> : vector<64x256xf32>
    %4 = tpu.matmul %0, %3, %cst_5 {dimension_numbers = #tpu.dot_dimension_numbers<[1], [0], [0], [1], [0, 0, 1, 1], [], []>} : vector<64x64xf32>, vector<64x256xf32>, vector<64x256xf32> -> vector<64x256xf32>
    %c0_6 = arith.constant 0 : index
    %c0_7 = arith.constant 0 : index
    %5 = vector.load %arg4[%c0_6, %c0_7] : memref<1x256xf32, #tpu.memory_space<vmem>>, vector<1x256xf32>
    %6 = vector.broadcast %5 : vector<1x256xf32> to vector<64x256xf32>
    %7 = arith.addf %4, %6 : vector<64x256xf32>
    %cst_8 = arith.constant 0.000000e+00 : f32
    %8 = vector.broadcast %cst_8 : f32 to vector<64x256xf32>
    %9 = arith.maximumf %7, %8 : vector<64x256xf32>
    %c0_9 = arith.constant 0 : index
    %c0_10 = arith.constant 0 : index
    %10 = vector.load %arg5[%c0_9, %c0_10] : memref<256x128xf32, #tpu.memory_space<vmem>>, vector<256x128xf32>
    %cst_11 = arith.constant dense<0.000000e+00> : vector<64x128xf32>
    %11 = tpu.matmul %9, %10, %cst_11 {dimension_numbers = #tpu.dot_dimension_numbers<[1], [0], [0], [1], [0, 0, 1, 1], [], []>} : vector<64x256xf32>, vector<256x128xf32>, vector<64x128xf32> -> vector<64x128xf32>
    %cst_12 = arith.constant dense<0.000000e+00> : vector<64x128xf32>
    %12 = tpu.matmul %0, %11, %cst_12 {dimension_numbers = #tpu.dot_dimension_numbers<[1], [0], [0], [1], [0, 0, 1, 1], [], []>} : vector<64x64xf32>, vector<64x128xf32>, vector<64x128xf32> -> vector<64x128xf32>
    %c0_13 = arith.constant 0 : index
    %c0_14 = arith.constant 0 : index
    %13 = vector.load %arg6[%c0_13, %c0_14] : memref<1x128xf32, #tpu.memory_space<vmem>>, vector<1x128xf32>
    %14 = vector.broadcast %13 : vector<1x128xf32> to vector<64x128xf32>
    %15 = arith.addf %12, %14 : vector<64x128xf32>
    %c0_15 = arith.constant 0 : index
    %c0_16 = arith.constant 0 : index
    %16 = vector.load %arg7[%c0_15, %c0_16] : memref<64x128xf32, #tpu.memory_space<vmem>>, vector<64x128xf32>
    tpu.vector_store %arg7[%c0_15, %c0_16], %15 {strides = array<i32>} : memref<64x128xf32, #tpu.memory_space<vmem>>, vector<64x128xf32>,
    return
  }
  func.func @transform_0(%arg0: i32) -> (i32, i32) {
    %c0_i32 = arith.constant 0 : i32
    %c0_i32_0 = arith.constant 0 : i32
    %c0_i32_1 = arith.constant 0 : i32
    return %c0_i32, %c0_i32_0 : i32, i32
  }
  func.func @transform_1(%arg0: i32) -> (i32, i32) {
    %c0_i32 = arith.constant 0 : i32
    %c0_i32_0 = arith.constant 0 : i32
    %c0_i32_1 = arith.constant 0 : i32
    return %c0_i32, %c0_i32_0 : i32, i32
  }
  func.func @transform_2(%arg0: i32) -> (i32, i32) {
    %c0_i32 = arith.constant 0 : i32
    %c0_i32_0 = arith.constant 0 : i32
    %c0_i32_1 = arith.constant 0 : i32
    return %c0_i32, %c0_i32_0 : i32, i32
  }
  func.func @transform_3(%arg0: i32) -> (i32, i32) {
    %c0_i32 = arith.constant 0 : i32
    %c0_i32_0 = arith.constant 0 : i32
    %c0_i32_1 = arith.constant 0 : i32
    return %c0_i32, %c0_i32_0 : i32, i32
  }
  func.func @transform_4(%arg0: i32) -> (i32, i32) {
    %c0_i32 = arith.constant 0 : i32
    %c0_i32_0 = arith.constant 0 : i32
    %c0_i32_1 = arith.constant 0 : i32
    return %c0_i32, %c0_i32_0 : i32, i32
  }
  func.func @transform_5(%arg0: i32) -> (i32, i32) {
    %c0_i32 = arith.constant 0 : i32
    %c0_i32_0 = arith.constant 0 : i32
    %c0_i32_1 = arith.constant 0 : i32
    return %c0_i32, %c0_i32_0 : i32, i32
  }
  func.func @transform_6(%arg0: i32) -> (i32, i32) {
    %c0_i32 = arith.constant 0 : i32
    %c0_i32_0 = arith.constant 0 : i32
    %c0_i32_1 = arith.constant 0 : i32
    return %c0_i32, %c0_i32_0 : i32, i32
  }
}

</mosaic_0001>

<llo_original>
// kernel: tpu_custom_call.1
$region0: #{tpu_custom_call.1}
  #allocation0 [shape = 'u32[]', space=smem, size = 0x4, offset = 0x4, fixed_abs, tag = 'smem constant byte address 0x4 - core index']
  #allocation1 [shape = 'u32[72,128]{1,0:T(1,128)}', space=vmem, size = 0x9000, scoped, tag = 'internal scratch']
  %s0 = inlined_call_operand.vmem [shape: f32[64,64], index: 0, kind: input, shape index: {}]
  %s1 = inlined_call_operand.vmem [shape: f32[64,16], index: 1, kind: input, shape index: {}]
  %s2 = inlined_call_operand.hbm [shape: f32[16,256], index: 2, kind: input, shape index: {}]
  %s3 = inlined_call_operand.vmem [shape: f32[1,256], index: 3, kind: input, shape index: {}]
  %s4 = inlined_call_operand.hbm [shape: f32[256,128], index: 4, kind: input, shape index: {}]
  %s5 = inlined_call_operand.vmem [shape: f32[1,128], index: 5, kind: input, shape index: {}]
  %s6 = inlined_call_operand.hbm [shape: f32[64,128], index: 6, kind: output, shape index: {}]
  %s7 = sld [smem:[#allocation0]]
  $region42: #{tpu_custom_call.1} parent=0
    _
  %s9 = ssub.s32 1, %s7
  %s10 = scalar_select 0, %s9, %s7
  $region1: #{tpu_custom_call.1} parent=0
    #allocation2 [shape = 'u8[16384]{0}', space=vmem, size = 0x4000, scoped, tag = 'input window, operand 2, single buffered']
    #allocation3 [shape = 's32[1]{0}', space=sflag, size = 0x4, scoped, tag = 'scoped memory for tpu_custom_call.1']
    #allocation4 [shape = 's32[1]{0}', space=sflag, size = 0x4, scoped, tag = 'scoped memory for tpu_custom_call.1']
    #allocation5 [shape = 'u8[131072]{0}', space=vmem, size = 0x20000, scoped, tag = 'input window, operand 4, single buffered']
    #allocation6 [shape = 's32[1]{0}', space=sflag, size = 0x4, scoped, tag = 'scoped memory for tpu_custom_call.1']
    #allocation7 [shape = 'u8[32768]{0}', space=vmem, size = 0x8000, scoped, tag = 'output window, operand 0, single buffered']
    %11 = vsyncpa [#allocation3], 0
    %12 = vsyncpa [#allocation6], 0
    %13 = vsyncpa [#allocation4], 0
    // Predicated region
    $region2: #{tpu_custom_call.1} parent=1 // pred_check
      _
    $region3: #{tpu_custom_call.1} parent=1 // pred_check_branch
      %15 = sbr.rel (0) target = $region5
    $region4: #{tpu_custom_call.1} parent=1 // pred_region
      _
    $region5: #{tpu_custom_call.1} parent=1 // pred_fallthru
      _
    // Predicated region
    $region6: #{tpu_custom_call.1} parent=1 // pred_check
      _
    $region7: #{tpu_custom_call.1} parent=1 // pred_check_branch
      %17 = sbr.rel (0) target = $region9
    $region8: #{tpu_custom_call.1} parent=1 // pred_region
      _
    $region9: #{tpu_custom_call.1} parent=1 // pred_fallthru
      _
    // Predicated region
    $region10: #{tpu_custom_call.1} parent=1 // pred_check
      _
    $region11: #{tpu_custom_call.1} parent=1 // pred_check_branch
      %19 = sbr.rel (0) target = $region13
    $region12: #{tpu_custom_call.1} parent=1 // pred_region
      %21 = vsyncadd [#allocation3], 0
      %s22 = sshll.u32 %s2, 4
      %s23 = int_to_ptr.hbm [resolvable:$true] %s22
      %s24 = sshll.u32 [#allocation2], 4
      %s25 = int_to_ptr.vmem [resolvable:$true] %s24
      %30 = dma.hbm_to_vmem [thread:$0]  %s23, 512, %s25, [#allocation3], 256, 256, 16
    $region13: #{tpu_custom_call.1} parent=1 // pred_fallthru
      _
    // Predicated region
    $region14: #{tpu_custom_call.1} parent=1 // pred_check
      _
    $region15: #{tpu_custom_call.1} parent=1 // pred_check_branch
      %32 = sbr.rel (0) target = $region17
    $region16: #{tpu_custom_call.1} parent=1 // pred_region
      _
    $region17: #{tpu_custom_call.1} parent=1 // pred_fallthru
      _
    // Predicated region
    $region18: #{tpu_custom_call.1} parent=1 // pred_check
      _
    $region19: #{tpu_custom_call.1} parent=1 // pred_check_branch
      %34 = sbr.rel (0) target = $region21
    $region20: #{tpu_custom_call.1} parent=1 // pred_region
      %36 = vsyncadd [#allocation6], 0
      %s37 = sshll.u32 %s4, 4
      %s38 = int_to_ptr.hbm [resolvable:$true] %s37
      %s39 = sshll.u32 [#allocation5], 4
      %s40 = int_to_ptr.vmem [resolvable:$true] %s39
      %45 = dma.hbm_to_vmem [thread:$0]  %s38, 4096, %s40, [#allocation6], 128, 128, 8
    $region21: #{tpu_custom_call.1} parent=1 // pred_fallthru
      _
    // Predicated region
    $region22: #{tpu_custom_call.1} parent=1 // pred_check
      _
    $region23: #{tpu_custom_call.1} parent=1 // pred_check_branch
      %47 = sbr.rel (0) target = $region25
    $region24: #{tpu_custom_call.1} parent=1 // pred_region
      _
    $region25: #{tpu_custom_call.1} parent=1 // pred_fallthru
      _
    // Predicated region
    $region26: #{tpu_custom_call.1} parent=1 // pred_check
      _
    $region27: #{tpu_custom_call.1} parent=1 // pred_check_branch
      %49 = sbr.rel (0) target = $region29
    $region28: #{tpu_custom_call.1} parent=1 // pred_region
      %51 = dma.done [#allocation3], 512
    $region29: #{tpu_custom_call.1} parent=1 // pred_fallthru
      _
    // Predicated region
    $region30: #{tpu_custom_call.1} parent=1 // pred_check
      _
    $region31: #{tpu_custom_call.1} parent=1 // pred_check_branch
      %53 = sbr.rel (0) target = $region33
    $region32: #{tpu_custom_call.1} parent=1 // pred_region
      %55 = dma.done [#allocation6], 4096
    $region33: #{tpu_custom_call.1} parent=1 // pred_fallthru
      _
    %v56 = vld [vmem:[%s0] sm:$0xff]
    %v57 = vld [vmem:[%s0 + $0x8] sm:$0xff]
    %v58 = vld [vmem:[%s0 + $0x10] sm:$0xff]
    %v59 = vld [vmem:[%s0 + $0x18] sm:$0xff]
    %v60 = vld [vmem:[%s0 + $0x20] sm:$0xff]
    %v61 = vld [vmem:[%s0 + $0x28] sm:$0xff]
    %v62 = vld [vmem:[%s0 + $0x30] sm:$0xff]
    %v63 = vld [vmem:[%s0 + $0x38] sm:$0xff]
    %v64 = vld [vmem:[%s1] sm:$0xff]
    %v65 = vld [vmem:[%s1 + $0x8] sm:$0xff]
    %v66 = vld [vmem:[%s1 + $0x10] sm:$0xff]
    %v67 = vld [vmem:[%s1 + $0x18] sm:$0xff]
    %v68 = vld [vmem:[%s1 + $0x20] sm:$0xff]
    %v69 = vld [vmem:[%s1 + $0x28] sm:$0xff]
    %v70 = vld [vmem:[%s1 + $0x30] sm:$0xff]
    %v71 = vld [vmem:[%s1 + $0x38] sm:$0xff]
    %v72 = vld [vmem:[#allocation2] sm:$0xff]
    %v73 = vld [vmem:[#allocation2 + $0x8] sm:$0xff]
    %v74 = vld [vmem:[#allocation2 + $0x10] sm:$0xff]
    %v75 = vld [vmem:[#allocation2 + $0x18] sm:$0xff]
    %vm76 = vcmask 130048
    %v78 = vsel %vm76, %v64, 0
    %v81 = vsel %vm76, %v65, 0
    %v84 = vsel %vm76, %v66, 0
    %v87 = vsel %vm76, %v67, 0
    %v90 = vsel %vm76, %v68, 0
    %v93 = vsel %vm76, %v69, 0
    %v96 = vsel %vm76, %v70, 0
    %v99 = vsel %vm76, %v71, 0
    %101 = vmatpush.msra.mxu0 0.0
    %102 = vmatpush.msra.mxu0 0.0
    %103 = vmatpush.msra.mxu0 0.0
    %104 = vmatpush.msra.mxu0 0.0
    %105 = vmatpush.msra.mxu0 0.0
    %106 = vmatpush.msra.mxu0 0.0
    %107 = vmatpush.msra.mxu0 0.0
    %108 = vmatpush.msra.mxu0 0.0
    %109 = vmatpush.msra.mxu0 0.0
    %110 = vmatpush.msra.mxu0 0.0
    %111 = vmatpush.msra.mxu0 0.0
    %112 = vmatpush.msra.mxu0 0.0
    %113 = vmatpush.msra.mxu0 0.0
    %114 = vmatpush.msra.mxu0 0.0
    %115 = vmatpush.msra.mxu0 %v74
    %116 = vmatpush.msra.mxu0 %v72
    %117 = vmatmul.f32.gmra.mxu0 %v78
    %v118 = vpop.f32.mrf.mxu0
    %v119 = vadd.f32 0.0, %v118
    %120 = vmatmul.f32.gmra.mxu0 %v81
    %v121 = vpop.f32.mrf.mxu0
    %v122 = vadd.f32 0.0, %v121
    %123 = vmatmul.f32.gmra.mxu0 %v84
    %v124 = vpop.f32.mrf.mxu0
    %v125 = vadd.f32 0.0, %v124
    %126 = vmatmul.f32.gmra.mxu0 %v87
    %v127 = vpop.f32.mrf.mxu0
    %v128 = vadd.f32 0.0, %v127
    %129 = vmatmul.f32.gmra.mxu0 %v90
    %v130 = vpop.f32.mrf.mxu0
    %v131 = vadd.f32 0.0, %v130
    %132 = vmatmul.f32.gmra.mxu0 %v93
    %v133 = vpop.f32.mrf.mxu0
    %v134 = vadd.f32 0.0, %v133
    %135 = vmatmul.f32.gmra.mxu0 %v96
    %v136 = vpop.f32.mrf.mxu0
    %v137 = vadd.f32 0.0, %v136
    %138 = vmatmul.f32.gmra.mxu0 %v99
    %v139 = vpop.f32.mrf.mxu0
    %v140 = vadd.f32 0.0, %v139
    %141 = vdwg.mxu0
    %142 = vmatpush.msra.mxu0 0.0
    %143 = vmatpush.msra.mxu0 0.0
    %144 = vmatpush.msra.mxu0 0.0
    %145 = vmatpush.msra.mxu0 0.0
    %146 = vmatpush.msra.mxu0 0.0
    %147 = vmatpush.msra.mxu0 0.0
    %148 = vmatpush.msra.mxu0 0.0
    %149 = vmatpush.msra.mxu0 0.0
    %150 = vmatpush.msra.mxu0 0.0
    %151 = vmatpush.msra.mxu0 0.0
    %152 = vmatpush.msra.mxu0 0.0
    %153 = vmatpush.msra.mxu0 0.0
    %154 = vmatpush.msra.mxu0 0.0
    %155 = vmatpush.msra.mxu0 0.0
    %156 = vmatpush.msra.mxu0 %v75
    %157 = vmatpush.msra.mxu0 %v73
    %158 = vmatmul.f32.gmra.mxu0 %v78
    %v159 = vpop.f32.mrf.mxu0
    %v160 = vadd.f32 0.0, %v159
    %161 = vmatmul.f32.gmra.mxu0 %v81
    %v162 = vpop.f32.mrf.mxu0
    %v163 = vadd.f32 0.0, %v162
    %164 = vmatmul.f32.gmra.mxu0 %v84
    %v165 = vpop.f32.mrf.mxu0
    %v166 = vadd.f32 0.0, %v165
    %167 = vmatmul.f32.gmra.mxu0 %v87
    %v168 = vpop.f32.mrf.mxu0
    %v169 = vadd.f32 0.0, %v168
    %170 = vmatmul.f32.gmra.mxu0 %v90
    %v171 = vpop.f32.mrf.mxu0
    %v172 = vadd.f32 0.0, %v171
    %173 = vmatmul.f32.gmra.mxu0 %v93
    %v174 = vpop.f32.mrf.mxu0
    %v175 = vadd.f32 0.0, %v174
    %176 = vmatmul.f32.gmra.mxu0 %v96
    %v177 = vpop.f32.mrf.mxu0
    %v178 = vadd.f32 0.0, %v177
    %179 = vmatmul.f32.gmra.mxu0 %v99
    %v180 = vpop.f32.mrf.mxu0
    %v181 = vadd.f32 0.0, %v180
    %182 = vdwg.mxu0
    %v183 = vld [vmem:[%s3] sm:$0x3]
    %v185 = vperm.slane %v183, 0
    %v186 = vperm.slane %v183, 1
    %vm189 = vcmask 523264
    %v191 = vsel %vm189, %v56, 0
    %v194 = vsel %vm189, %v57, 0
    %v197 = vsel %vm189, %v58, 0
    %v200 = vsel %vm189, %v59, 0
    %v203 = vsel %vm189, %v60, 0
    %v206 = vsel %vm189, %v61, 0
    %v209 = vsel %vm189, %v62, 0
    %v212 = vsel %vm189, %v63, 0
    %214 = vmatpush.msra.mxu0 0.0
    %215 = vmatpush.msra.mxu0 0.0
    %216 = vmatpush.msra.mxu0 0.0
    %217 = vmatpush.msra.mxu0 0.0
    %218 = vmatpush.msra.mxu0 0.0
    %219 = vmatpush.msra.mxu0 0.0
    %220 = vmatpush.msra.mxu0 0.0
    %221 = vmatpush.msra.mxu0 0.0
    %222 = vmatpush.msra.mxu0 %v140
    %223 = vmatpush.msra.mxu0 %v137
    %224 = vmatpush.msra.mxu0 %v134
    %225 = vmatpush.msra.mxu0 %v131
    %226 = vmatpush.msra.mxu0 %v128
    %227 = vmatpush.msra.mxu0 %v125
    %228 = vmatpush.msra.mxu0 %v122
    %229 = vmatpush.msra.mxu0 %v119
    %230 = vmatmul.f32.gmra.mxu0 %v191
    %v231 = vpop.f32.mrf.mxu0
    %v232 = vadd.f32 %v185, %v231
    %233 = vmatmul.f32.gmra.mxu0 %v194
    %v234 = vpop.f32.mrf.mxu0
    %v235 = vadd.f32 %v185, %v234
    %236 = vmatmul.f32.gmra.mxu0 %v197
    %v237 = vpop.f32.mrf.mxu0
    %v238 = vadd.f32 %v185, %v237
    %239 = vmatmul.f32.gmra.mxu0 %v200
    %v240 = vpop.f32.mrf.mxu0
    %v241 = vadd.f32 %v185, %v240
    %242 = vmatmul.f32.gmra.mxu0 %v203
    %v243 = vpop.f32.mrf.mxu0
    %v244 = vadd.f32 %v185, %v243
    %245 = vmatmul.f32.gmra.mxu0 %v206
    %v246 = vpop.f32.mrf.mxu0
    %v247 = vadd.f32 %v185, %v246
    %248 = vmatmul.f32.gmra.mxu0 %v209
    %v249 = vpop.f32.mrf.mxu0
    %v250 = vadd.f32 %v185, %v249
    %251 = vmatmul.f32.gmra.mxu0 %v212
    %v252 = vpop.f32.mrf.mxu0
    %v253 = vadd.f32 %v185, %v252
    %254 = vdwg.mxu0
    %255 = vmatpush.msra.mxu0 0.0
    %256 = vmatpush.msra.mxu0 0.0
    %257 = vmatpush.msra.mxu0 0.0
    %258 = vmatpush.msra.mxu0 0.0
    %259 = vmatpush.msra.mxu0 0.0
    %260 = vmatpush.msra.mxu0 0.0
    %261 = vmatpush.msra.mxu0 0.0
    %262 = vmatpush.msra.mxu0 0.0
    %263 = vmatpush.msra.mxu0 %v181
    %264 = vmatpush.msra.mxu0 %v178
    %265 = vmatpush.msra.mxu0 %v175
    %266 = vmatpush.msra.mxu0 %v172
    %267 = vmatpush.msra.mxu0 %v169
    %268 = vmatpush.msra.mxu0 %v166
    %269 = vmatpush.msra.mxu0 %v163
    %270 = vmatpush.msra.mxu0 %v160
    %271 = vmatmul.f32.gmra.mxu0 %v191
    %v272 = vpop.f32.mrf.mxu0
    %v273 = vadd.f32 %v186, %v272
    %274 = vmatmul.f32.gmra.mxu0 %v194
    %v275 = vpop.f32.mrf.mxu0
    %v276 = vadd.f32 %v186, %v275
    %277 = vmatmul.f32.gmra.mxu0 %v197
    %v278 = vpop.f32.mrf.mxu0
    %v279 = vadd.f32 %v186, %v278
    %280 = vmatmul.f32.gmra.mxu0 %v200
    %v281 = vpop.f32.mrf.mxu0
    %v282 = vadd.f32 %v186, %v281
    %283 = vmatmul.f32.gmra.mxu0 %v203
    %v284 = vpop.f32.mrf.mxu0
    %v285 = vadd.f32 %v186, %v284
    %286 = vmatmul.f32.gmra.mxu0 %v206
    %v287 = vpop.f32.mrf.mxu0
    %v288 = vadd.f32 %v186, %v287
    %289 = vmatmul.f32.gmra.mxu0 %v209
    %v290 = vpop.f32.mrf.mxu0
    %v291 = vadd.f32 %v186, %v290
    %292 = vmatmul.f32.gmra.mxu0 %v212
    %v293 = vpop.f32.mrf.mxu0
    %v294 = vadd.f32 %v186, %v293
    %295 = vdwg.mxu0
    %v296 = vmax.f32 %v232, 0.0
    %v297 = vmax.f32 %v273, 0.0
    %v298 = vmax.f32 %v235, 0.0
    %v299 = vmax.f32 %v276, 0.0
    %v300 = vmax.f32 %v238, 0.0
    %v301 = vmax.f32 %v279, 0.0
    %v302 = vmax.f32 %v241, 0.0
    %v303 = vmax.f32 %v282, 0.0
    %v304 = vmax.f32 %v244, 0.0
    %v305 = vmax.f32 %v285, 0.0
    %v306 = vmax.f32 %v247, 0.0
    %v307 = vmax.f32 %v288, 0.0
    %v308 = vmax.f32 %v250, 0.0
    %v309 = vmax.f32 %v291, 0.0
    %v310 = vmax.f32 %v253, 0.0
    %v311 = vmax.f32 %v294, 0.0
    %v312 = vld [vmem:[#allocation5] sm:$0xff]
    %v313 = vld [vmem:[#allocation5 + $0x8] sm:$0xff]
    %v314 = vld [vmem:[#allocation5 + $0x10] sm:$0xff]
    %v315 = vld [vmem:[#allocation5 + $0x18] sm:$0xff]
    %v316 = vld [vmem:[#allocation5 + $0x20] sm:$0xff]
    %v317 = vld [vmem:[#allocation5 + $0x28] sm:$0xff]
    %v318 = vld [vmem:[#allocation5 + $0x30] sm:$0xff]
    %v319 = vld [vmem:[#allocation5 + $0x38] sm:$0xff]
    %v320 = vld [vmem:[#allocation5 + $0x40] sm:$0xff]
    %v321 = vld [vmem:[#allocation5 + $0x48] sm:$0xff]
    %v322 = vld [vmem:[#allocation5 + $0x50] sm:$0xff]
    %v323 = vld [vmem:[#allocation5 + $0x58] sm:$0xff]
    %v324 = vld [vmem:[#allocation5 + $0x60] sm:$0xff]
    %v325 = vld [vmem:[#allocation5 + $0x68] sm:$0xff]
    %v326 = vld [vmem:[#allocation5 + $0x70] sm:$0xff]
    %v327 = vld [vmem:[#allocation5 + $0x78] sm:$0xff]
    %v328 = vld [vmem:[#allocation5 + $0x80] sm:$0xff]
    %v329 = vld [vmem:[#allocation5 + $0x88] sm:$0xff]
    %v330 = vld [vmem:[#allocation5 + $0x90] sm:$0xff]
    %v331 = vld [vmem:[#allocation5 + $0x98] sm:$0xff]
    %v332 = vld [vmem:[#allocation5 + $0xa0] sm:$0xff]
    %v333 = vld [vmem:[#allocation5 + $0xa8] sm:$0xff]
    %v334 = vld [vmem:[#allocation5 + $0xb0] sm:$0xff]
    %v335 = vld [vmem:[#allocation5 + $0xb8] sm:$0xff]
    %v336 = vld [vmem:[#allocation5 + $0xc0] sm:$0xff]
    %v337 = vld [vmem:[#allocation5 + $0xc8] sm:$0xff]
    %v338 = vld [vmem:[#allocation5 + $0xd0] sm:$0xff]
    %v339 = vld [vmem:[#allocation5 + $0xd8] sm:$0xff]
    %v340 = vld [vmem:[#allocation5 + $0xe0] sm:$0xff]
    %v341 = vld [vmem:[#allocation5 + $0xe8] sm:$0xff]
    %v342 = vld [vmem:[#allocation5 + $0xf0] sm:$0xff]
    %v343 = vld [vmem:[#allocation5 + $0xf8] sm:$0xff]
    %344 = vmatpush.msra.mxu0 %v327
    %345 = vmatpush.msra.mxu0 %v326
    %346 = vmatpush.msra.mxu0 %v325
    %347 = vmatpush.msra.mxu0 %v324
    %348 = vmatpush.msra.mxu0 %v323
    %349 = vmatpush.msra.mxu0 %v322
    %350 = vmatpush.msra.mxu0 %v321
    %351 = vmatpush.msra.mxu0 %v320
    %352 = vmatpush.msra.mxu0 %v319
    %353 = vmatpush.msra.mxu0 %v318
    %354 = vmatpush.msra.mxu0 %v317
    %355 = vmatpush.msra.mxu0 %v316
    %356 = vmatpush.msra.mxu0 %v315
    %357 = vmatpush.msra.mxu0 %v314
    %358 = vmatpush.msra.mxu0 %v313
    %359 = vmatpush.msra.mxu0 %v312
    %360 = vmatmul.f32.gmra.mxu0 %v296
    %v361 = vpop.f32.mrf.mxu0
    %v362 = vadd.f32 0.0, %v361
    %363 = vmatmul.f32.gmra.mxu0 %v298
    %v364 = vpop.f32.mrf.mxu0
    %v365 = vadd.f32 0.0, %v364
    %366 = vmatmul.f32.gmra.mxu0 %v300
    %v367 = vpop.f32.mrf.mxu0
    %v368 = vadd.f32 0.0, %v367
    %369 = vmatmul.f32.gmra.mxu0 %v302
    %v370 = vpop.f32.mrf.mxu0
    %v371 = vadd.f32 0.0, %v370
    %372 = vmatmul.f32.gmra.mxu0 %v304
    %v373 = vpop.f32.mrf.mxu0
    %v374 = vadd.f32 0.0, %v373
    %375 = vmatmul.f32.gmra.mxu0 %v306
    %v376 = vpop.f32.mrf.mxu0
    %v377 = vadd.f32 0.0, %v376
    %378 = vmatmul.f32.gmra.mxu0 %v308
    %v379 = vpop.f32.mrf.mxu0
    %v380 = vadd.f32 0.0, %v379
    %381 = vmatmul.f32.gmra.mxu0 %v310
    %v382 = vpop.f32.mrf.mxu0
    %v383 = vadd.f32 0.0, %v382
    %384 = vdwg.mxu0
    %385 = vmatpush.msra.mxu0 %v343
    %386 = vmatpush.msra.mxu0 %v342
    %387 = vmatpush.msra.mxu0 %v341
    %388 = vmatpush.msra.mxu0 %v340
    %389 = vmatpush.msra.mxu0 %v339
    %390 = vmatpush.msra.mxu0 %v338
    %391 = vmatpush.msra.mxu0 %v337
    %392 = vmatpush.msra.mxu0 %v336
    %393 = vmatpush.msra.mxu0 %v335
    %394 = vmatpush.msra.mxu0 %v334
    %395 = vmatpush.msra.mxu0 %v333
    %396 = vmatpush.msra.mxu0 %v332
    %397 = vmatpush.msra.mxu0 %v331
    %398 = vmatpush.msra.mxu0 %v330
    %399 = vmatpush.msra.mxu0 %v329
    %400 = vmatpush.msra.mxu0 %v328
    %401 = vmatmul.f32.gmra.mxu0 %v297
    %v402 = vpop.f32.mrf.mxu0
    %v403 = vadd.f32 %v362, %v402
    %404 = vmatmul.f32.gmra.mxu0 %v299
    %v405 = vpop.f32.mrf.mxu0
    %v406 = vadd.f32 %v365, %v405
    %407 = vmatmul.f32.gmra.mxu0 %v301
    %v408 = vpop.f32.mrf.mxu0
    %v409 = vadd.f32 %v368, %v408
    %410 = vmatmul.f32.gmra.mxu0 %v303
    %v411 = vpop.f32.mrf.mxu0
    %v412 = vadd.f32 %v371, %v411
    %413 = vmatmul.f32.gmra.mxu0 %v305
    %v414 = vpop.f32.mrf.mxu0
    %v415 = vadd.f32 %v374, %v414
    %416 = vmatmul.f32.gmra.mxu0 %v307
    %v417 = vpop.f32.mrf.mxu0
    %v418 = vadd.f32 %v377, %v417
    %419 = vmatmul.f32.gmra.mxu0 %v309
    %v420 = vpop.f32.mrf.mxu0
    %v421 = vadd.f32 %v380, %v420
    %422 = vmatmul.f32.gmra.mxu0 %v311
    %v423 = vpop.f32.mrf.mxu0
    %v424 = vadd.f32 %v383, %v423
    %425 = vdwg.mxu0
    %v426 = vld [vmem:[%s5] sm:$0x1]
    %v428 = vperm.slane %v426, 0
    %430 = vmatpush.msra.mxu0 0.0
    %431 = vmatpush.msra.mxu0 0.0
    %432 = vmatpush.msra.mxu0 0.0
    %433 = vmatpush.msra.mxu0 0.0
    %434 = vmatpush.msra.mxu0 0.0
    %435 = vmatpush.msra.mxu0 0.0
    %436 = vmatpush.msra.mxu0 0.0
    %437 = vmatpush.msra.mxu0 0.0
    %438 = vmatpush.msra.mxu0 %v424
    %439 = vmatpush.msra.mxu0 %v421
    %440 = vmatpush.msra.mxu0 %v418
    %441 = vmatpush.msra.mxu0 %v415
    %442 = vmatpush.msra.mxu0 %v412
    %443 = vmatpush.msra.mxu0 %v409
    %444 = vmatpush.msra.mxu0 %v406
    %445 = vmatpush.msra.mxu0 %v403
    %446 = vmatmul.f32.gmra.mxu0 %v191
    %v447 = vpop.f32.mrf.mxu0
    %v448 = vadd.f32 %v428, %v447
    %449 = vmatmul.f32.gmra.mxu0 %v194
    %v450 = vpop.f32.mrf.mxu0
    %v451 = vadd.f32 %v428, %v450
    %452 = vmatmul.f32.gmra.mxu0 %v197
    %v453 = vpop.f32.mrf.mxu0
    %v454 = vadd.f32 %v428, %v453
    %455 = vmatmul.f32.gmra.mxu0 %v200
    %v456 = vpop.f32.mrf.mxu0
    %v457 = vadd.f32 %v428, %v456
    %458 = vmatmul.f32.gmra.mxu0 %v203
    %v459 = vpop.f32.mrf.mxu0
    %v460 = vadd.f32 %v428, %v459
    %461 = vmatmul.f32.gmra.mxu0 %v206
    %v462 = vpop.f32.mrf.mxu0
    %v463 = vadd.f32 %v428, %v462
    %464 = vmatmul.f32.gmra.mxu0 %v209
    %v465 = vpop.f32.mrf.mxu0
    %v466 = vadd.f32 %v428, %v465
    %467 = vmatmul.f32.gmra.mxu0 %v212
    %v468 = vpop.f32.mrf.mxu0
    %v469 = vadd.f32 %v428, %v468
    %470 = vdwg.mxu0
    %471 = vst [vmem:[#allocation7] sm:$0xff] %v448
    %472 = vst [vmem:[#allocation7 + $0x8] sm:$0xff] %v451
    %473 = vst [vmem:[#allocation7 + $0x10] sm:$0xff] %v454
    %474 = vst [vmem:[#allocation7 + $0x18] sm:$0xff] %v457
    %475 = vst [vmem:[#allocation7 + $0x20] sm:$0xff] %v460
    %476 = vst [vmem:[#allocation7 + $0x28] sm:$0xff] %v463
    %477 = vst [vmem:[#allocation7 + $0x30] sm:$0xff] %v466
    %478 = vst [vmem:[#allocation7 + $0x38] sm:$0xff] %v469
    // Predicated region
    $region34: #{tpu_custom_call.1} parent=1 // pred_check
      _
    $region35: #{tpu_custom_call.1} parent=1 // pred_check_branch
      %480 = sbr.rel (0) target = $region37
    $region36: #{tpu_custom_call.1} parent=1 // pred_region
      %482 = vsyncadd [#allocation4], 0
      %s483 = sshll.u32 [#allocation7], 4
      %s484 = int_to_ptr.vmem [resolvable:$true] %s483
      %s485 = sshll.u32 %s6, 4
      %s486 = int_to_ptr.hbm [resolvable:$true] %s485
      %491 = dma.vmem_to_hbm [thread:$0]  %s484, 1024, %s486, [#allocation4], 128, 128, 8
    $region37: #{tpu_custom_call.1} parent=1 // pred_fallthru
      _
    // Predicated region
    $region38: #{tpu_custom_call.1} parent=1 // pred_check
      _
    $region39: #{tpu_custom_call.1} parent=1 // pred_check_branch
      %493 = sbr.rel (0) target = $region41
    $region40: #{tpu_custom_call.1} parent=1 // pred_region
      %495 = dma.done [#allocation4], 1024
    $region41: #{tpu_custom_call.1} parent=1 // pred_fallthru
      _
    %496 = vsyncpa [#allocation3], 1
    %497 = vsyncpa [#allocation6], 1
    %498 = vsyncpa [#allocation4], 1

</llo_original>
